<compile_context>
chip_gen: v5e
topology: v5e:2x2
jax: 0.10.0
libtpu: 0.0.40
codegen_flags: <defaults>
</compile_context>

<pallas_src>
import math

import jax
import jax.numpy as jnp
from jax import lax
from jax.experimental import pallas as pl
from jax.experimental.pallas import tpu as pltpu

_LN_EPS = 1e-5
_VMEM_LIMIT = 48 * 1024 * 1024  # safe on v5e/v6e (128 MiB) and v7x (64 MiB)


# ----------------------------------------------------------------------------- helpers
def _round_up(x, m):
    return ((x + m - 1) // m) * m


def _row_tile(m, max_tile=512):
    """Pick a row tile (multiple of 8) and padded row count; prefer >=2 grid steps."""
    m8 = _round_up(m, 8)
    tm = min(max_tile, m8)
    if m8 // tm < 2 and m8 >= 16:
        tm = _round_up(m8 // 2, 8)          # ensure >=2 steps so megacore can split rows
    m_pad = _round_up(m, tm)
    return m_pad, tm


def _seq_tile(n, max_tile=256):
    n8 = _round_up(n, 8)
    t = min(max_tile, n8)
    n_pad = _round_up(n, t)
    return n_pad, t


def _pick_h_tile(hid, max_tile=512):
    if hid <= max_tile:
        return hid
    for t in range(max_tile, 127, -128):
        if hid % t == 0:
            return t
    return hid


def _pad_axis(a, axis, new_size):
    if a.shape[axis] == new_size:
        return a
    pads = [(0, 0)] * a.ndim
    pads[axis] = (0, new_size - a.shape[axis])
    return jnp.pad(a, pads)


def _gelu_exact(x):
    # nn.GELU default = exact (erf-based) GELU; computed in f32 inside the kernels.
    return 0.5 * x * (1.0 + lax.erf(x * (1.0 / math.sqrt(2.0))))


# ----------------------------------------------------------------------------- kernels
def make_ln_qkv_kernel(eps):
    def kernel(x_ref, g_ref, b_ref, w_ref, o_ref):
        x = x_ref[...].astype(jnp.float32)
        mu = jnp.mean(x, axis=-1, keepdims=True)
        var = jnp.mean(jnp.square(x - mu), axis=-1, keepdims=True)
        xln = (x - mu) * lax.rsqrt(var + eps)
        xln = xln * g_ref[...].astype(jnp.float32) + b_ref[...].astype(jnp.float32)
        # keep matmul operands in the weight dtype; accumulate in f32 on the MXU
        o = jnp.dot(xln.astype(w_ref.dtype), w_ref[...],
                    preferred_element_type=jnp.float32)
        o_ref[...] = o.astype(o_ref.dtype)
    return kernel


def make_attn_kernel(scale, n_valid, tkv, need_mask):
    def kernel(q_ref, k_ref, v_ref, o_ref, m_sc, l_sc, acc_sc):
        ki = pl.program_id(2)

        @pl.when(ki == 0)
        def _():
            m_sc[...] = jnp.full(m_sc.shape, -jnp.inf, dtype=jnp.float32)
            l_sc[...] = jnp.zeros(l_sc.shape, dtype=jnp.float32)
            acc_sc[...] = jnp.zeros(acc_sc.shape, dtype=jnp.float32)

        q = q_ref[...]
        k = k_ref[...]
        s = lax.dot_general(q, k, (((1,), (1,)), ((), ())),
                            preferred_element_type=jnp.float32) * scale
        if need_mask:  # mask padded kv columns (static decision)
            col = ki * tkv + lax.broadcasted_iota(jnp.int32, s.shape, 1)
            s = jnp.where(col < n_valid, s, -1e30)

        m_new = jnp.maximum(m_sc[...], s.max(axis=-1, keepdims=True))
        alpha = jnp.exp(m_sc[...] - m_new)
        p = jnp.exp(s - m_new)
        l_sc[...] = alpha * l_sc[...] + p.sum(axis=-1, keepdims=True)
        acc_sc[...] = alpha * acc_sc[...] + jnp.dot(
            p.astype(v_ref.dtype), v_ref[...], preferred_element_type=jnp.float32)
        m_sc[...] = m_new

        @pl.when(ki == pl.num_programs(2) - 1)
        def _():
            o_ref[...] = (acc_sc[...] / l_sc[...]).astype(o_ref.dtype)
    return kernel


def proj_residual_kernel(xres_ref, a_ref, wp_ref, bp_ref, o_ref):
    o = jnp.dot(a_ref[...], wp_ref[...], preferred_element_type=jnp.float32)
    o = o + bp_ref[...].astype(jnp.float32) + xres_ref[...].astype(jnp.float32)
    o_ref[...] = o.astype(o_ref.dtype)


def make_ln_mlp_kernel(eps):
    def kernel(y_ref, g_ref, b_ref, w1_ref, b1_ref, w2_ref, b2_ref,
               o_ref, xln_sc, acc_sc):
        h = pl.program_id(1)

        @pl.when(h == 0)
        def _():
            y = y_ref[...].astype(jnp.float32)
            mu = jnp.mean(y, axis=-1, keepdims=True)
            var = jnp.mean(jnp.square(y - mu), axis=-1, keepdims=True)
            yln = (y - mu) * lax.rsqrt(var + eps)
            xln_sc[...] = (yln * g_ref[...].astype(jnp.float32)
                           + b_ref[...].astype(jnp.float32))
            acc_sc[...] = jnp.zeros(acc_sc.shape, dtype=jnp.float32)

        xln = xln_sc[...].astype(w1_ref.dtype)
        hid = jnp.dot(xln, w1_ref[...], preferred_element_type=jnp.float32)
        hid = hid + b1_ref[...].astype(jnp.float32)
        act = _gelu_exact(hid)                                # f32 elementwise (v5e-safe)
        acc_sc[...] += jnp.dot(act.astype(w2_ref.dtype), w2_ref[...],
                               preferred_element_type=jnp.float32)

        @pl.when(h == pl.num_programs(1) - 1)
        def _():
            out = (y_ref[...].astype(jnp.float32) + acc_sc[...]
                   + b2_ref[...].astype(jnp.float32))
            o_ref[...] = out.astype(o_ref.dtype)
    return kernel


# ----------------------------------------------------------------------------- wrapper
def block_forward(x, params, H, W, num_heads, *, eps=_LN_EPS):
    """x: (B, N, C) with N == H*W. sr_ratio=1, apply_transform=False path."""
    # TODO(synk): sr_ratio>1 (depthwise Conv2d spatial reduction + LayerNorm) and
    # apply_transform (1x1 conv + InstanceNorm on attention maps) paths not implemented.
    B, N, C = x.shape
    assert N == H * W, "N must equal H*W"
    assert C % num_heads == 0
    nH = num_heads
    D = C // nH
    scale = D ** -0.5
    M = B * N
    dt = x.dtype

    g1 = params["g1"].reshape(1, C)
    bt1 = params["bt1"].reshape(1, C)
    g2 = params["g2"].reshape(1, C)
    bt2 = params["bt2"].reshape(1, C)
    wqkv_t = jnp.concatenate([params["wq"].T, params["wkv"].T], axis=1)  # (C, 3C)
    wp_t = params["wp"].T
    bp = params["bp"].reshape(1, C)
    w1_t = params["w1"].T                   # (C, Hid)
    b1 = params["b1"].reshape(1, -1)
    w2_t = params["w2"].T                   # (Hid, C)
    b2 = params["b2"].reshape(1, C)
    Hid = w1_t.shape[1]

    m_pad, tm = _row_tile(M)
    x2d = x.reshape(M, C)
    x2d_p = _pad_axis(x2d, 0, m_pad)

    # -------- 1) LayerNorm1 + fused q/k/v projection ---------------------------------
    qkv = pl.pallas_call(
        make_ln_qkv_kernel(eps),
        out_shape=jax.ShapeDtypeStruct((m_pad, 3 * C), dt),
        grid_spec=pltpu.PrefetchScalarGridSpec(
            num_scalar_prefetch=0,
            grid=(m_pad // tm,),
            in_specs=[
                pl.BlockSpec((tm, C), lambda i: (i, 0)),
                pl.BlockSpec((1, C), lambda i: (0, 0)),
                pl.BlockSpec((1, C), lambda i: (0, 0)),
                pl.BlockSpec((C, 3 * C), lambda i: (0, 0)),
            ],
            out_specs=pl.BlockSpec((tm, 3 * C), lambda i: (i, 0)),
        ),
        compiler_params=pltpu.CompilerParams(
            dimension_semantics=("parallel",),
            vmem_limit_bytes=_VMEM_LIMIT),
    )(x2d_p, g1, bt1, wqkv_t)
    qkv = qkv[:M]

    # reshape to per-head layout (B*nH, N, D); matches the PyTorch reshape/permute order
    q = qkv[:, :C].reshape(B, N, nH, D).transpose(0, 2, 1, 3).reshape(B * nH, N, D)
    k = qkv[:, C:2 * C].reshape(B, N, nH, D).transpose(0, 2, 1, 3).reshape(B * nH, N, D)
    v = qkv[:, 2 * C:].reshape(B, N, nH, D).transpose(0, 2, 1, 3).reshape(B * nH, N, D)

    # -------- 2) flash-style attention ------------------------------------------------
    n_pad, tn = _seq_tile(N)
    need_mask = n_pad != N
    q_p = _pad_axis(q, 1, n_pad)
    k_p = _pad_axis(k, 1, n_pad)
    v_p = _pad_axis(v, 1, n_pad)
    BH = B * nH

    attn_out = pl.pallas_call(
        make_attn_kernel(scale, N, tn, need_mask),
        out_shape=jax.ShapeDtypeStruct((BH, n_pad, D), dt),
        grid_spec=pltpu.PrefetchScalarGridSpec(
            num_scalar_prefetch=0,
            grid=(BH, n_pad // tn, n_pad // tn),
            in_specs=[
                pl.BlockSpec((None, tn, D), lambda b, qi, ki: (b, qi, 0)),
                pl.BlockSpec((None, tn, D), lambda b, qi, ki: (b, ki, 0)),
                pl.BlockSpec((None, tn, D), lambda b, qi, ki: (b, ki, 0)),
            ],
            out_specs=pl.BlockSpec((None, tn, D), lambda b, qi, ki: (b, qi, 0)),
            scratch_shapes=[
                pltpu.VMEM((tn, 1), jnp.float32),
                pltpu.VMEM((tn, 1), jnp.float32),
                pltpu.VMEM((tn, D), jnp.float32),
            ],
        ),
        compiler_params=pltpu.CompilerParams(
            dimension_semantics=("parallel", "parallel", "arbitrary"),
            vmem_limit_bytes=_VMEM_LIMIT),
    )(q_p, k_p, v_p)
    attn_out = attn_out[:, :N, :]
    attn2d = attn_out.reshape(B, nH, N, D).transpose(0, 2, 1, 3).reshape(M, C)
    attn2d_p = _pad_axis(attn2d, 0, m_pad)

    # -------- 3) output projection + residual -----------------------------------------
    y2d = pl.pallas_call(
        proj_residual_kernel,
        out_shape=jax.ShapeDtypeStruct((m_pad, C), dt),
        grid_spec=pltpu.PrefetchScalarGridSpec(
            num_scalar_prefetch=0,
            grid=(m_pad // tm,),
            in_specs=[
                pl.BlockSpec((tm, C), lambda i: (i, 0)),
                pl.BlockSpec((tm, C), lambda i: (i, 0)),
                pl.BlockSpec((C, C), lambda i: (0, 0)),
                pl.BlockSpec((1, C), lambda i: (0, 0)),
            ],
            out_specs=pl.BlockSpec((tm, C), lambda i: (i, 0)),
        ),
        compiler_params=pltpu.CompilerParams(
            dimension_semantics=("parallel",),
            vmem_limit_bytes=_VMEM_LIMIT),
    )(x2d_p, attn2d_p, wp_t, bp)

    # -------- 4) LayerNorm2 + MLP (hidden-dim tiled) + residual ------------------------
    tH = _pick_h_tile(Hid)
    itemsize = jnp.dtype(dt).itemsize
    cost = pl.CostEstimate(
        flops=4 * M * C * Hid,
        transcendentals=M * Hid,
        bytes_accessed=itemsize * (2 * M * C + 2 * C * Hid + Hid + 3 * C),
    )
    out2d = pl.pallas_call(
        make_ln_mlp_kernel(eps),
        out_shape=jax.ShapeDtypeStruct((m_pad, C), dt),
        grid_spec=pltpu.PrefetchScalarGridSpec(
            num_scalar_prefetch=0,
            grid=(m_pad // tm, Hid // tH),
            in_specs=[
                pl.BlockSpec((tm, C), lambda i, h: (i, 0)),
                pl.BlockSpec((1, C), lambda i, h: (0, 0)),
                pl.BlockSpec((1, C), lambda i, h: (0, 0)),
                pl.BlockSpec((C, tH), lambda i, h: (0, h)),
                pl.BlockSpec((1, tH), lambda i, h: (0, h)),
                pl.BlockSpec((tH, C), lambda i, h: (h, 0)),
                pl.BlockSpec((1, C), lambda i, h: (0, 0)),
            ],
            out_specs=pl.BlockSpec((tm, C), lambda i, h: (i, 0)),
            scratch_shapes=[
                pltpu.VMEM((tm, C), jnp.float32),   # LN(x) cache across hidden tiles
                pltpu.VMEM((tm, C), jnp.float32),   # fc2 accumulator
            ],
        ),
        compiler_params=pltpu.CompilerParams(
            dimension_semantics=("parallel", "arbitrary"),
            vmem_limit_bytes=_VMEM_LIMIT),
        cost_estimate=cost,
    )(y2d, g2, bt2, w1_t, b1, w2_t, b2)

    return out2d[:M].reshape(B, N, C)


# ----------------------------------------------------------------------------- reference
def reference_block(x, p, H, W, num_heads, eps=_LN_EPS):
    B, N, C = x.shape
    nH = num_heads
    D = C // nH
    scale = D ** -0.5

    def ln(t, g, b):
        mu = jnp.mean(t, -1, keepdims=True)
        var = jnp.mean((t - mu) ** 2, -1, keepdims=True)
        return (t - mu) / jnp.sqrt(var + eps) * g + b

    xn = ln(x, p["g1"], p["bt1"])
    q = (xn @ p["wq"].T).reshape(B, N, nH, D).transpose(0, 2, 1, 3)
    kv = (xn @ p["wkv"].T).reshape(B, N, 2, nH, D).transpose(2, 0, 3, 1, 4)
    k, v = kv[0], kv[1]
    attn = jnp.einsum("bhqd,bhkd->bhqk", q, k) * scale
    attn = jax.nn.softmax(attn, axis=-1)
    o = jnp.einsum("bhqk,bhkd->bhqd", attn, v).transpose(0, 2, 1, 3).reshape(B, N, C)
    x = x + o @ p["wp"].T + p["bp"]
    xn2 = ln(x, p["g2"], p["bt2"])
    h = _gelu_exact(xn2 @ p["w1"].T + p["b1"])
    x = x + h @ p["w2"].T + p["b2"]
    return x


# ----------------------------------------------------------------------------- main
if __name__ == "__main__":
    B, Himg, Wimg = 2, 8, 8
    dim = 64
    num_heads = 2
    mlp_ratio = 4.0
    N = Himg * Wimg
    Hid = int(dim * mlp_ratio)

    key = jax.random.PRNGKey(0)
    ks = jax.random.split(key, 14)
    x = jax.random.normal(ks[0], (B, N, dim), dtype=jnp.float32)

    def lin_w(k, out_f, in_f):
        lim = 1.0 / math.sqrt(in_f)
        return jax.random.uniform(k, (out_f, in_f), minval=-lim, maxval=lim,
                                  dtype=jnp.float32)

    def lin_b(k, out_f, in_f):
        lim = 1.0 / math.sqrt(in_f)
        return jax.random.uniform(k, (out_f,), minval=-lim, maxval=lim,
                                  dtype=jnp.float32)

    params = dict(
        g1=1.0 + 0.1 * jax.random.normal(ks[1], (dim,), jnp.float32),
        bt1=0.05 * jax.random.normal(ks[2], (dim,), jnp.float32),
        wq=lin_w(ks[3], dim, dim),               # qkv_bias=False (module default)
        wkv=lin_w(ks[4], 2 * dim, dim),
        wp=lin_w(ks[5], dim, dim),
        bp=lin_b(ks[6], dim, dim),
        g2=1.0 + 0.1 * jax.random.normal(ks[7], (dim,), jnp.float32),
        bt2=0.05 * jax.random.normal(ks[8], (dim,), jnp.float32),
        w1=lin_w(ks[9], Hid, dim),
        b1=lin_b(ks[10], Hid, dim),
        w2=lin_w(ks[11], dim, Hid),
        b2=lin_b(ks[12], dim, Hid),
    )

    out = block_forward(x, params, Himg, Wimg, num_heads)
    out = jax.block_until_ready(out)

    ref = reference_block(x, params, Himg, Wimg, num_heads)
    assert out.shape == ref.shape
    assert jnp.allclose(out, ref, atol=1e-4, rtol=1e-4), (
        "mismatch vs reference, max abs err = "
        f"{float(jnp.max(jnp.abs(out - ref)))}")

    print("KERNEL_OK")
</pallas_src>

<mosaic_0001>
module attributes {stable_mosaic.version = 11 : i64} {
  func.func @kernel(%arg0: i32, %arg1: memref<64x64xf32, #tpu.memory_space<vmem>>, %arg2: memref<1x64xf32, #tpu.memory_space<vmem>>, %arg3: memref<1x64xf32, #tpu.memory_space<vmem>>, %arg4: memref<64x192xf32, #tpu.memory_space<vmem>>, %arg5: memref<64x192xf32, #tpu.memory_space<vmem>>) attributes {dimension_semantics = [#tpu.dimension_semantics<parallel>], iteration_bounds = array<i64: 2>, scalar_prefetch = 0 : i64, scratch_operands = 0 : i64, tpu.core_type = #tpu.core_type<tc>, window_params = [{transform_indices = @transform_0, window_bounds = array<i64: 64, 64>}, {pipeline_mode = #tpu.pipeline_mode<synchronous>, transform_indices = @transform_1, window_bounds = array<i64: 1, 64>}, {pipeline_mode = #tpu.pipeline_mode<synchronous>, transform_indices = @transform_2, window_bounds = array<i64: 1, 64>}, {pipeline_mode = #tpu.pipeline_mode<synchronous>, transform_indices = @transform_3, window_bounds = array<i64: 64, 192>}, {transform_indices = @transform_4, window_bounds = array<i64: 64, 192>}]} {
    %c0 = arith.constant 0 : index
    %c0_0 = arith.constant 0 : index
    %0 = vector.load %arg1[%c0, %c0_0] : memref<64x64xf32, #tpu.memory_space<vmem>>, vector<64x64xf32>
    %cst = arith.constant dense<0.000000e+00> : vector<64xf32>
    %1 = vector.multi_reduction <add>, %0, %cst [1] : vector<64x64xf32> to vector<64xf32>
    %2 = vector.shape_cast %1 : vector<64xf32> to vector<64x1xf32>
    %cst_1 = arith.constant 6.400000e+01 : f32
    %3 = vector.broadcast %cst_1 : f32 to vector<64x1xf32>
    %4 = arith.divf %2, %3 : vector<64x1xf32>
    %5 = vector.broadcast %4 : vector<64x1xf32> to vector<64x64xf32>
    %6 = arith.subf %0, %5 : vector<64x64xf32>
    %7 = arith.mulf %6, %6 : vector<64x64xf32>
    %cst_2 = arith.constant dense<0.000000e+00> : vector<64xf32>
    %8 = vector.multi_reduction <add>, %7, %cst_2 [1] : vector<64x64xf32> to vector<64xf32>
    %9 = vector.shape_cast %8 : vector<64xf32> to vector<64x1xf32>
    %cst_3 = arith.constant 6.400000e+01 : f32
    %10 = vector.broadcast %cst_3 : f32 to vector<64x1xf32>
    %11 = arith.divf %9, %10 : vector<64x1xf32>
    %12 = vector.broadcast %4 : vector<64x1xf32> to vector<64x64xf32>
    %13 = arith.subf %0, %12 : vector<64x64xf32>
    %cst_4 = arith.constant 9.99999974E-6 : f32
    %14 = vector.broadcast %cst_4 : f32 to vector<64x1xf32>
    %15 = arith.addf %11, %14 : vector<64x1xf32>
    %16 = math.rsqrt %15 : vector<64x1xf32>
    %17 = vector.broadcast %16 : vector<64x1xf32> to vector<64x64xf32>
    %18 = arith.mulf %13, %17 : vector<64x64xf32>
    %c0_5 = arith.constant 0 : index
    %c0_6 = arith.constant 0 : index
    %19 = vector.load %arg2[%c0_5, %c0_6] : memref<1x64xf32, #tpu.memory_space<vmem>>, vector<1x64xf32>
    %20 = vector.broadcast %19 : vector<1x64xf32> to vector<64x64xf32>
    %21 = arith.mulf %18, %20 : vector<64x64xf32>
    %c0_7 = arith.constant 0 : index
    %c0_8 = arith.constant 0 : index
    %22 = vector.load %arg3[%c0_7, %c0_8] : memref<1x64xf32, #tpu.memory_space<vmem>>, vector<1x64xf32>
    %23 = vector.broadcast %22 : vector<1x64xf32> to vector<64x64xf32>
    %24 = arith.addf %21, %23 : vector<64x64xf32>
    %c0_9 = arith.constant 0 : index
    %c0_10 = arith.constant 0 : index
    %25 = vector.load %arg4[%c0_9, %c0_10] : memref<64x192xf32, #tpu.memory_space<vmem>>, vector<64x192xf32>
    %cst_11 = arith.constant dense<0.000000e+00> : vector<64x192xf32>
    %26 = tpu.matmul %24, %25, %cst_11 {dimension_numbers = #tpu.dot_dimension_numbers<[1], [0], [0], [1], [0, 0, 1, 1], [], []>} : vector<64x64xf32>, vector<64x192xf32>, vector<64x192xf32> -> vector<64x192xf32>
    %c0_12 = arith.constant 0 : index
    %c0_13 = arith.constant 0 : index
    %27 = vector.load %arg5[%c0_12, %c0_13] : memref<64x192xf32, #tpu.memory_space<vmem>>, vector<64x192xf32>
    tpu.vector_store %arg5[%c0_12, %c0_13], %26 {strides = array<i32>} : memref<64x192xf32, #tpu.memory_space<vmem>>, vector<64x192xf32>,
    return
  }
  func.func @transform_0(%arg0: i32) -> (i32, i32) {
    %c0_i32 = arith.constant 0 : i32
    %c0_i32_0 = arith.constant 0 : i32
    return %arg0, %c0_i32 : i32, i32
  }
  func.func @transform_1(%arg0: i32) -> (i32, i32) {
    %c0_i32 = arith.constant 0 : i32
    %c0_i32_0 = arith.constant 0 : i32
    %c0_i32_1 = arith.constant 0 : i32
    return %c0_i32, %c0_i32_0 : i32, i32
  }
  func.func @transform_2(%arg0: i32) -> (i32, i32) {
    %c0_i32 = arith.constant 0 : i32
    %c0_i32_0 = arith.constant 0 : i32
    %c0_i32_1 = arith.constant 0 : i32
    return %c0_i32, %c0_i32_0 : i32, i32
  }
  func.func @transform_3(%arg0: i32) -> (i32, i32) {
    %c0_i32 = arith.constant 0 : i32
    %c0_i32_0 = arith.constant 0 : i32
    %c0_i32_1 = arith.constant 0 : i32
    return %c0_i32, %c0_i32_0 : i32, i32
  }
  func.func @transform_4(%arg0: i32) -> (i32, i32) {
    %c0_i32 = arith.constant 0 : i32
    %c0_i32_0 = arith.constant 0 : i32
    return %arg0, %c0_i32 : i32, i32
  }
}

</mosaic_0001>

<llo_original>
// kernel: tpu_custom_call.1
$region0: #{tpu_custom_call.1}
  #allocation0 [shape = 'u32[]', space=smem, size = 0x4, offset = 0x4, fixed_abs, tag = 'smem constant byte address 0x4 - core index']
  #allocation1 [shape = 'u32[72,128]{1,0:T(1,128)}', space=vmem, size = 0x9000, scoped, tag = 'internal scratch']
  %s0 = inlined_call_operand.vmem [shape: f32[128,64], index: 0, kind: input, shape index: {}]
  %s1 = inlined_call_operand.vmem [shape: f32[1,64], index: 1, kind: input, shape index: {}]
  %s2 = inlined_call_operand.vmem [shape: f32[1,64], index: 2, kind: input, shape index: {}]
  %s3 = inlined_call_operand.vmem [shape: f32[64,192], index: 3, kind: input, shape index: {}]
  %s4 = inlined_call_operand.vmem [shape: f32[128,192], index: 4, kind: output, shape index: {}]
  %s5 = sld [smem:[#allocation0]]
  $region49: #{tpu_custom_call.1} parent=0
    _
  %s7 = ssub.s32 1, %s5
  %s8 = scalar_select 0, %s7, %s5
  loop: start=0, step=1, limit=4
  $region2: #{tpu_custom_call.1} parent=0 // loop_pre_header
    _
  $region3: #{tpu_custom_call.1} parent=0 // loop_header
    %s10 = sphi 0, %s14
    %p11 = scmp.ge.s32.totalorder %s10, 4
    %s20 = sphi 0, %s22
    %s23 = sphi 0, %s20
    %s24 = sphi 0, %s23
    %s40 = sphi 0, %s24
    %s44 = sphi 0, %s44
    %s46 = sphi 0, %s44
    %s47 = sphi 0, %s46
    %s61 = sphi 0, %s47
    %s65 = sphi 0, %s65
    %s67 = sphi 0, %s65
    %s68 = sphi 0, %s67
    %s82 = sphi 0, %s68
    %s86 = sphi 0, %s86
    %s88 = sphi 0, %s86
    %s89 = sphi 0, %s88
    %s103 = sphi 0, %s89
    %s109 = sphi 0, %s111
    %s112 = sphi 0, %s109
    %s113 = sphi 0, %s112
    %s129 = sphi 0, %s113
  $region4: #{tpu_custom_call.1} parent=0 // loop_header_branch
    %13 = sbr.rel (%p11) target = $region8
  $region5: #{tpu_custom_call.1} parent=0 // loop_body
    %s15 = ssub.s32 %s10, 1
    %s16 = ssub.s32 %s10, 2
    %s17 = sadd.s32 %s10, 1
    %s18 = ssub.s32 %s10, %s17
    %p19 = scmp.eq.s32.totalorder %s18, 0
    %s21 = sadd.s32 %s20, 1
    %s22 = scalar_select %p19, %s20, %s21
    %p25 = pneg %p19
    %p26 = scmp.eq.s32.totalorder %s10, 1
    %p27 = por %p25, %p26
    %p28 = scmp.ne.s32.totalorder %s20, %s23
    %p29 = scmp.eq.s32.totalorder %s10, 0
    %p30 = por %p28, %p29
    %p31 = scmp.ne.s32.totalorder %s20, %s23
    %p32 = scmp.eq.s32.totalorder %s15, 1
    %p33 = por %p31, %p32
    %p34 = scmp.ne.s32.totalorder %s23, %s24
    %p35 = scmp.eq.s32.totalorder %s15, 0
    %p36 = por %p34, %p35
    %p37 = scmp.ne.s32.totalorder %s23, %s24
    %p38 = scmp.eq.s32.totalorder %s16, 1
    %p39 = por %p37, %p38
    %p41 = scmp.ne.s32.totalorder %s24, %s40
    %p42 = scmp.eq.s32.totalorder %s16, 0
    %p43 = por %p41, %p42
    %s45 = sadd.s32 %s44, 1
    %p48 = scmp.eq.s32.totalorder %s10, 1
    %p49 = scmp.ne.s32.totalorder %s44, %s46
    %p50 = scmp.eq.s32.totalorder %s10, 0
    %p51 = por %p49, %p50
    %p52 = scmp.ne.s32.totalorder %s44, %s46
    %p53 = scmp.eq.s32.totalorder %s15, 1
    %p54 = por %p52, %p53
    %p55 = scmp.ne.s32.totalorder %s46, %s47
    %p56 = scmp.eq.s32.totalorder %s15, 0
    %p57 = por %p55, %p56
    %p58 = scmp.ne.s32.totalorder %s46, %s47
    %p59 = scmp.eq.s32.totalorder %s16, 1
    %p60 = por %p58, %p59
    %p62 = scmp.ne.s32.totalorder %s47, %s61
    %p63 = scmp.eq.s32.totalorder %s16, 0
    %p64 = por %p62, %p63
    %s66 = sadd.s32 %s65, 1
    %p69 = scmp.eq.s32.totalorder %s10, 1
    %p70 = scmp.ne.s32.totalorder %s65, %s67
    %p71 = scmp.eq.s32.totalorder %s10, 0
    %p72 = por %p70, %p71
    %p73 = scmp.ne.s32.totalorder %s65, %s67
    %p74 = scmp.eq.s32.totalorder %s15, 1
    %p75 = por %p73, %p74
    %p76 = scmp.ne.s32.totalorder %s67, %s68
    %p77 = scmp.eq.s32.totalorder %s15, 0
    %p78 = por %p76, %p77
    %p79 = scmp.ne.s32.totalorder %s67, %s68
    %p80 = scmp.eq.s32.totalorder %s16, 1
    %p81 = por %p79, %p80
    %p83 = scmp.ne.s32.totalorder %s68, %s82
    %p84 = scmp.eq.s32.totalorder %s16, 0
    %p85 = por %p83, %p84
    %s87 = sadd.s32 %s86, 1
    %p90 = scmp.eq.s32.totalorder %s10, 1
    %p91 = scmp.ne.s32.totalorder %s86, %s88
    %p92 = scmp.eq.s32.totalorder %s10, 0
    %p93 = por %p91, %p92
    %p94 = scmp.ne.s32.totalorder %s86, %s88
    %p95 = scmp.eq.s32.totalorder %s15, 1
    %p96 = por %p94, %p95
    %p97 = scmp.ne.s32.totalorder %s88, %s89
    %p98 = scmp.eq.s32.totalorder %s15, 0
    %p99 = por %p97, %p98
    %p100 = scmp.ne.s32.totalorder %s88, %s89
    %p101 = scmp.eq.s32.totalorder %s16, 1
    %p102 = por %p100, %p101
    %p104 = scmp.ne.s32.totalorder %s89, %s103
    %p105 = scmp.eq.s32.totalorder %s16, 0
    %p106 = por %p104, %p105
    %s107 = ssub.s32 %s10, %s17
    %p108 = scmp.eq.s32.totalorder %s107, 0
    %s110 = sadd.s32 %s109, 1
    %s111 = scalar_select %p108, %s109, %s110
    %p114 = pneg %p108
    %p115 = scmp.eq.s32.totalorder %s10, 1
    %p116 = por %p114, %p115
    %p117 = scmp.ne.s32.totalorder %s109, %s112
    %p118 = scmp.eq.s32.totalorder %s10, 0
    %p119 = por %p117, %p118
    %p120 = scmp.ne.s32.totalorder %s109, %s112
    %p121 = scmp.eq.s32.totalorder %s15, 1
    %p122 = por %p120, %p121
    %p123 = scmp.ne.s32.totalorder %s112, %s113
    %p124 = scmp.eq.s32.totalorder %s15, 0
    %p125 = por %p123, %p124
    %p126 = scmp.ne.s32.totalorder %s112, %s113
    %p127 = scmp.eq.s32.totalorder %s16, 1
    %p128 = por %p126, %p127
    %p130 = scmp.ne.s32.totalorder %s113, %s129
    %p131 = scmp.eq.s32.totalorder %s16, 0
    %p132 = por %p130, %p131
    %p133 = scmp.le.s32.totalorder 1, %s10
    %p134 = scmp.lt.s32.totalorder %s10, 3
    %p135 = pnand %p133, %p134
    %p136 = pneg %p135
    // Predicated region
    $region9: #{tpu_custom_call.1} parent=5 // pred_check
      _
    $region10: #{tpu_custom_call.1} parent=5 // pred_check_branch
      %138 = sbr.rel (%p135) target = $region12
    $region11: #{tpu_custom_call.1} parent=5 // pred_region
      %s139 = ssub.s32 %s10, 1
      // Predicated region
      $region13: #{tpu_custom_call.1} parent=11 // pred_check
        %p140 = pneg %p57
      $region14: #{tpu_custom_call.1} parent=11 // pred_check_branch
        %142 = sbr.rel (%p140) target = $region16
      $region15: #{tpu_custom_call.1} parent=11 // pred_region
        _
      $region16: #{tpu_custom_call.1} parent=11 // pred_fallthru
        _
      // Predicated region
      $region17: #{tpu_custom_call.1} parent=11 // pred_check
        %p143 = pneg %p78
      $region18: #{tpu_custom_call.1} parent=11 // pred_check_branch
        %145 = sbr.rel (%p143) target = $region20
      $region19: #{tpu_custom_call.1} parent=11 // pred_region
        _
      $region20: #{tpu_custom_call.1} parent=11 // pred_fallthru
        _
      // Predicated region
      $region21: #{tpu_custom_call.1} parent=11 // pred_check
        %p146 = pneg %p99
      $region22: #{tpu_custom_call.1} parent=11 // pred_check_branch
        %148 = sbr.rel (%p146) target = $region24
      $region23: #{tpu_custom_call.1} parent=11 // pred_region
        _
      $region24: #{tpu_custom_call.1} parent=11 // pred_fallthru
        _
    $region12: #{tpu_custom_call.1} parent=5 // pred_fallthru
      _
    %p149 = scmp.lt.s32.totalorder %s10, 2
    // Predicated region
    $region25: #{tpu_custom_call.1} parent=5 // pred_check
      %p150 = pneg %p149
    $region26: #{tpu_custom_call.1} parent=5 // pred_check_branch
      %152 = sbr.rel (%p150) target = $region28
    $region27: #{tpu_custom_call.1} parent=5 // pred_region
      // Predicated region
      $region29: #{tpu_custom_call.1} parent=27 // pred_check
        %p153 = pneg %p30
      $region30: #{tpu_custom_call.1} parent=27 // pred_check_branch
        %155 = sbr.rel (%p153) target = $region32
      $region31: #{tpu_custom_call.1} parent=27 // pred_region
        %s156 = smul.u32 8, %s10
        %p157 = scmp.lt.s32.totalorder %s156, 15
        %s158 = scalar_select %p157, %s156, 15
        %s159 = smul.addr %s158, 8
        %s160 = scalar_lea.vmem %s0, %s159
        %s161 = smul.u32 8, %s10
      $region32: #{tpu_custom_call.1} parent=27 // pred_fallthru
        _
    $region28: #{tpu_custom_call.1} parent=5 // pred_fallthru
      _
    %p162 = scmp.le.s32.totalorder 1, %s10
    %p163 = scmp.lt.s32.totalorder %s10, 3
    %p164 = pnand %p162, %p163
    %p165 = pneg %p164
    // Predicated region
    $region33: #{tpu_custom_call.1} parent=5 // pred_check
      _
    $region34: #{tpu_custom_call.1} parent=5 // pred_check_branch
      %167 = sbr.rel (%p164) target = $region36
    $region35: #{tpu_custom_call.1} parent=5 // pred_region
      %s168 = ssub.s32 %s10, 1
      %s169 = smul.u32 8, %s15
      %p170 = scmp.lt.s32.totalorder %s169, 15
      %s171 = scalar_select %p170, %s169, 15
      %s172 = smul.addr %s171, 8
      %s173 = scalar_lea.vmem %s0, %s172
      %p174 = pneg %p36
      %p175 = pneg %p33
      %p176 = pneg %p57
      %p177 = pneg %p54
      %p178 = pneg %p78
      %p179 = pneg %p75
      %p180 = pneg %p99
      %p181 = pneg %p96
      %p182 = pneg %p125
      %p183 = pneg %p122
      %s184 = smul.u32 8, %s15
      %p185 = scmp.lt.s32.totalorder %s184, 15
      %s186 = scalar_select %p185, %s184, 15
      %s187 = smul.addr %s186, 2
      %s188 = smul.addr %s187, 8
      %s189 = scalar_lea.vmem %s4, %s188
      %s190 = smul.u32 8, %s15
      %p191 = scmp.lt.s32.totalorder %s190, 15
      %s192 = scalar_select %p191, %s190, 15
      %s193 = smul.addr %s192, 8
      %s194 = scalar_lea.vmem %s0, %s193
      %s195 = smul.u32 8, %s15
      %s196 = smul.u32 8, %s15
      %p197 = scmp.lt.s32.totalorder %s196, 15
      %s198 = scalar_select %p197, %s196, 15
      %s199 = smul.addr %s198, 2
      %s200 = smul.addr %s199, 8
      %s201 = scalar_lea.vmem %s4, %s200
      %s202 = smul.u32 8, %s15
      %v203 = vld [vmem:[%s194] sm:$0xff]
      %v204 = vld [vmem:[%s194 + $0x8] sm:$0xff]
      %v205 = vld [vmem:[%s194 + $0x10] sm:$0xff]
      %v206 = vld [vmem:[%s194 + $0x18] sm:$0xff]
      %v207 = vld [vmem:[%s194 + $0x20] sm:$0xff]
      %v208 = vld [vmem:[%s194 + $0x28] sm:$0xff]
      %v209 = vld [vmem:[%s194 + $0x30] sm:$0xff]
      %v210 = vld [vmem:[%s194 + $0x38] sm:$0xff]
      %vm211 = vcmask 523264
      %v212 = vsel %vm211, %v203, 0.0
      %213 = vadd.xlane.f32.xlu0 %v212
      %v214 = vpop.xlane.xlu0 %213
      %v215 = vsel %vm211, %v204, 0.0
      %216 = vadd.xlane.f32.xlu0 %v215
      %v217 = vpop.xlane.xlu0 %216
      %v218 = vsel %vm211, %v205, 0.0
      %219 = vadd.xlane.f32.xlu0 %v218
      %v220 = vpop.xlane.xlu0 %219
      %v221 = vsel %vm211, %v206, 0.0
      %222 = vadd.xlane.f32.xlu0 %v221
      %v223 = vpop.xlane.xlu0 %222
      %v224 = vsel %vm211, %v207, 0.0
      %225 = vadd.xlane.f32.xlu0 %v224
      %v226 = vpop.xlane.xlu0 %225
      %v227 = vsel %vm211, %v208, 0.0
      %228 = vadd.xlane.f32.xlu0 %v227
      %v229 = vpop.xlane.xlu0 %228
      %v230 = vsel %vm211, %v209, 0.0
      %231 = vadd.xlane.f32.xlu0 %v230
      %v232 = vpop.xlane.xlu0 %231
      %v233 = vsel %vm211, %v210, 0.0
      %234 = vadd.xlane.f32.xlu0 %v233
      %v235 = vpop.xlane.xlu0 %234
      %v236 = vrcp.pop 64.0
      %v237 = vmul.f32 64.0, %v236
      %v238 = vsub.f32 1.0, %v237
      %v239 = vmul.f32 %v236, %v238
      %v240 = vadd.f32 %v236, %v239
      %vm241 = vweird.f32 %v236
      %v242 = vsel %vm241, %v236, %v240
      %v243 = vmul.f32 %v214, %v242
      %v244 = vmul.f32 %v217, %v242
      %v245 = vmul.f32 %v220, %v242
      %v246 = vmul.f32 %v223, %v242
      %v247 = vmul.f32 %v226, %v242
      %v248 = vmul.f32 %v229, %v242
      %v249 = vmul.f32 %v232, %v242
      %v250 = vmul.f32 %v235, %v242
      %v251 = vsub.f32 %v203, %v243
      %v252 = vsub.f32 %v204, %v244
      %v253 = vsub.f32 %v205, %v245
      %v254 = vsub.f32 %v206, %v246
      %v255 = vsub.f32 %v207, %v247
      %v256 = vsub.f32 %v208, %v248
      %v257 = vsub.f32 %v209, %v249
      %v258 = vsub.f32 %v210, %v250
      %v259 = vmul.f32 %v251, %v251
      %v260 = vmul.f32 %v252, %v252
      %v261 = vmul.f32 %v253, %v253
      %v262 = vmul.f32 %v254, %v254
      %v263 = vmul.f32 %v255, %v255
      %v264 = vmul.f32 %v256, %v256
      %v265 = vmul.f32 %v257, %v257
      %v266 = vmul.f32 %v258, %v258
      %v267 = vsel %vm211, %v259, 0.0
      %268 = vadd.xlane.f32.xlu0 %v267
      %v269 = vpop.xlane.xlu0 %268
      %v270 = vsel %vm211, %v260, 0.0
      %271 = vadd.xlane.f32.xlu0 %v270
      %v272 = vpop.xlane.xlu0 %271
      %v273 = vsel %vm211, %v261, 0.0
      %274 = vadd.xlane.f32.xlu0 %v273
      %v275 = vpop.xlane.xlu0 %274
      %v276 = vsel %vm211, %v262, 0.0
      %277 = vadd.xlane.f32.xlu0 %v276
      %v278 = vpop.xlane.xlu0 %277
      %v279 = vsel %vm211, %v263, 0.0
      %280 = vadd.xlane.f32.xlu0 %v279
      %v281 = vpop.xlane.xlu0 %280
      %v282 = vsel %vm211, %v264, 0.0
      %283 = vadd.xlane.f32.xlu0 %v282
      %v284 = vpop.xlane.xlu0 %283
      %v285 = vsel %vm211, %v265, 0.0
      %286 = vadd.xlane.f32.xlu0 %v285
      %v287 = vpop.xlane.xlu0 %286
      %v288 = vsel %vm211, %v266, 0.0
      %289 = vadd.xlane.f32.xlu0 %v288
      %v290 = vpop.xlane.xlu0 %289
      %v291 = vmul.f32 %v269, %v242
      %v292 = vmul.f32 %v272, %v242
      %v293 = vmul.f32 %v275, %v242
      %v294 = vmul.f32 %v278, %v242
      %v295 = vmul.f32 %v281, %v242
      %v296 = vmul.f32 %v284, %v242
      %v297 = vmul.f32 %v287, %v242
      %v298 = vmul.f32 %v290, %v242
      %v299 = vadd.f32 %v291, 1e-05
      %v300 = vadd.f32 %v292, 1e-05
      %v301 = vadd.f32 %v293, 1e-05
      %v302 = vadd.f32 %v294, 1e-05
      %v303 = vadd.f32 %v295, 1e-05
      %v304 = vadd.f32 %v296, 1e-05
      %v305 = vadd.f32 %v297, 1e-05
      %v306 = vadd.f32 %v298, 1e-05
      %v307 = vrsqrt.pop %v299
      %v308 = vmul.f32 %v307, %v299
      %v309 = vmul.f32 %v308, %v307
      %v310 = vmul.f32 0.5, %v309
      %v311 = vsub.f32 1.5, %v310
      %v312 = vmul.f32 %v307, %v311
      %vm313 = vweird.f32 %v299
      %vm314 = vweird.f32 %v307
      %vm315 = vmor %vm313, %vm314
      %v316 = vsel %vm315, %v307, %v312
      %v317 = vrsqrt.pop %v300
      %v318 = vmul.f32 %v317, %v300
      %v319 = vmul.f32 %v318, %v317
      %v320 = vmul.f32 0.5, %v319
      %v321 = vsub.f32 1.5, %v320
      %v322 = vmul.f32 %v317, %v321
      %vm323 = vweird.f32 %v300
      %vm324 = vweird.f32 %v317
      %vm325 = vmor %vm323, %vm324
      %v326 = vsel %vm325, %v317, %v322
      %v327 = vrsqrt.pop %v301
      %v328 = vmul.f32 %v327, %v301
      %v329 = vmul.f32 %v328, %v327
      %v330 = vmul.f32 0.5, %v329
      %v331 = vsub.f32 1.5, %v330
      %v332 = vmul.f32 %v327, %v331
      %vm333 = vweird.f32 %v301
      %vm334 = vweird.f32 %v327
      %vm335 = vmor %vm333, %vm334
      %v336 = vsel %vm335, %v327, %v332
      %v337 = vrsqrt.pop %v302
      %v338 = vmul.f32 %v337, %v302
      %v339 = vmul.f32 %v338, %v337
      %v340 = vmul.f32 0.5, %v339
      %v341 = vsub.f32 1.5, %v340
      %v342 = vmul.f32 %v337, %v341
      %vm343 = vweird.f32 %v302
      %vm344 = vweird.f32 %v337
      %vm345 = vmor %vm343, %vm344
      %v346 = vsel %vm345, %v337, %v342
      %v347 = vrsqrt.pop %v303
      %v348 = vmul.f32 %v347, %v303
      %v349 = vmul.f32 %v348, %v347
      %v350 = vmul.f32 0.5, %v349
      %v351 = vsub.f32 1.5, %v350
      %v352 = vmul.f32 %v347, %v351
      %vm353 = vweird.f32 %v303
      %vm354 = vweird.f32 %v347
      %vm355 = vmor %vm353, %vm354
      %v356 = vsel %vm355, %v347, %v352
      %v357 = vrsqrt.pop %v304
      %v358 = vmul.f32 %v357, %v304
      %v359 = vmul.f32 %v358, %v357
      %v360 = vmul.f32 0.5, %v359
      %v361 = vsub.f32 1.5, %v360
      %v362 = vmul.f32 %v357, %v361
      %vm363 = vweird.f32 %v304
      %vm364 = vweird.f32 %v357
      %vm365 = vmor %vm363, %vm364
      %v366 = vsel %vm365, %v357, %v362
      %v367 = vrsqrt.pop %v305
      %v368 = vmul.f32 %v367, %v305
      %v369 = vmul.f32 %v368, %v367
      %v370 = vmul.f32 0.5, %v369
      %v371 = vsub.f32 1.5, %v370
      %v372 = vmul.f32 %v367, %v371
      %vm373 = vweird.f32 %v305
      %vm374 = vweird.f32 %v367
      %vm375 = vmor %vm373, %vm374
      %v376 = vsel %vm375, %v367, %v372
      %v377 = vrsqrt.pop %v306
      %v378 = vmul.f32 %v377, %v306
      %v379 = vmul.f32 %v378, %v377
      %v380 = vmul.f32 0.5, %v379
      %v381 = vsub.f32 1.5, %v380
      %v382 = vmul.f32 %v377, %v381
      %vm383 = vweird.f32 %v306
      %vm384 = vweird.f32 %v377
      %vm385 = vmor %vm383, %vm384
      %v386 = vsel %vm385, %v377, %v382
      %v387 = vmul.f32 %v251, %v316
      %v388 = vmul.f32 %v252, %v326
      %v389 = vmul.f32 %v253, %v336
      %v390 = vmul.f32 %v254, %v346
      %v391 = vmul.f32 %v255, %v356
      %v392 = vmul.f32 %v256, %v366
      %v393 = vmul.f32 %v257, %v376
      %v394 = vmul.f32 %v258, %v386
      %v395 = vld [vmem:[%s1] sm:$0x1]
      %v397 = vperm.slane %v395, 0
      %v399 = vmul.f32 %v387, %v397
      %v400 = vmul.f32 %v388, %v397
      %v401 = vmul.f32 %v389, %v397
      %v402 = vmul.f32 %v390, %v397
      %v403 = vmul.f32 %v391, %v397
      %v404 = vmul.f32 %v392, %v397
      %v405 = vmul.f32 %v393, %v397
      %v406 = vmul.f32 %v394, %v397
      %v407 = vld [vmem:[%s2] sm:$0x1]
      %v409 = vperm.slane %v407, 0
      %v411 = vadd.f32 %v399, %v409
      %v412 = vadd.f32 %v400, %v409
      %v413 = vadd.f32 %v401, %v409
      %v414 = vadd.f32 %v402, %v409
      %v415 = vadd.f32 %v403, %v409
      %v416 = vadd.f32 %v404, %v409
      %v417 = vadd.f32 %v405, %v409
      %v418 = vadd.f32 %v406, %v409
      %v419 = vld [vmem:[%s3] sm:$0xff]
      %v420 = vld [vmem:[%s3 + $0x8] sm:$0xff]
      %v421 = vld [vmem:[%s3 + $0x10] sm:$0xff]
      %v422 = vld [vmem:[%s3 + $0x18] sm:$0xff]
      %v423 = vld [vmem:[%s3 + $0x20] sm:$0xff]
      %v424 = vld [vmem:[%s3 + $0x28] sm:$0xff]
      %v425 = vld [vmem:[%s3 + $0x30] sm:$0xff]
      %v426 = vld [vmem:[%s3 + $0x38] sm:$0xff]
      %v427 = vld [vmem:[%s3 + $0x40] sm:$0xff]
      %v428 = vld [vmem:[%s3 + $0x48] sm:$0xff]
      %v429 = vld [vmem:[%s3 + $0x50] sm:$0xff]
      %v430 = vld [vmem:[%s3 + $0x58] sm:$0xff]
      %v431 = vld [vmem:[%s3 + $0x60] sm:$0xff]
      %v432 = vld [vmem:[%s3 + $0x68] sm:$0xff]
      %v433 = vld [vmem:[%s3 + $0x70] sm:$0xff]
      %v434 = vld [vmem:[%s3 + $0x78] sm:$0xff]
      %v436 = vsel %vm211, %v411, 0
      %v439 = vsel %vm211, %v412, 0
      %v442 = vsel %vm211, %v413, 0
      %v445 = vsel %vm211, %v414, 0
      %v448 = vsel %vm211, %v415, 0
      %v451 = vsel %vm211, %v416, 0
      %v454 = vsel %vm211, %v417, 0
      %v457 = vsel %vm211, %v418, 0
      %459 = vmatpush.msra.mxu0 0.0
      %460 = vmatpush.msra.mxu0 0.0
      %461 = vmatpush.msra.mxu0 0.0
      %462 = vmatpush.msra.mxu0 0.0
      %463 = vmatpush.msra.mxu0 0.0
      %464 = vmatpush.msra.mxu0 0.0
      %465 = vmatpush.msra.mxu0 0.0
      %466 = vmatpush.msra.mxu0 0.0
      %467 = vmatpush.msra.mxu0 %v433
      %468 = vmatpush.msra.mxu0 %v431
      %469 = vmatpush.msra.mxu0 %v429
      %470 = vmatpush.msra.mxu0 %v427
      %471 = vmatpush.msra.mxu0 %v425
      %472 = vmatpush.msra.mxu0 %v423
      %473 = vmatpush.msra.mxu0 %v421
      %474 = vmatpush.msra.mxu0 %v419
      %475 = vmatmul.f32.gmra.mxu0 %v436
      %v476 = vpop.f32.mrf.mxu0
      %v477 = vadd.f32 0.0, %v476
      %478 = vmatmul.f32.gmra.mxu0 %v439
      %v479 = vpop.f32.mrf.mxu0
      %v480 = vadd.f32 0.0, %v479
      %481 = vmatmul.f32.gmra.mxu0 %v442
      %v482 = vpop.f32.mrf.mxu0
      %v483 = vadd.f32 0.0, %v482
      %484 = vmatmul.f32.gmra.mxu0 %v445
      %v485 = vpop.f32.mrf.mxu0
      %v486 = vadd.f32 0.0, %v485
      %487 = vmatmul.f32.gmra.mxu0 %v448
      %v488 = vpop.f32.mrf.mxu0
      %v489 = vadd.f32 0.0, %v488
      %490 = vmatmul.f32.gmra.mxu0 %v451
      %v491 = vpop.f32.mrf.mxu0
      %v492 = vadd.f32 0.0, %v491
      %493 = vmatmul.f32.gmra.mxu0 %v454
      %v494 = vpop.f32.mrf.mxu0
      %v495 = vadd.f32 0.0, %v494
      %496 = vmatmul.f32.gmra.mxu0 %v457
      %v497 = vpop.f32.mrf.mxu0
      %v498 = vadd.f32 0.0, %v497
      %499 = vdwg.mxu0
      %500 = vmatpush.msra.mxu0 0.0
      %501 = vmatpush.msra.mxu0 0.0
      %502 = vmatpush.msra.mxu0 0.0
      %503 = vmatpush.msra.mxu0 0.0
      %504 = vmatpush.msra.mxu0 0.0
      %505 = vmatpush.msra.mxu0 0.0
      %506 = vmatpush.msra.mxu0 0.0
      %507 = vmatpush.msra.mxu0 0.0
      %508 = vmatpush.msra.mxu0 %v434
      %509 = vmatpush.msra.mxu0 %v432
      %510 = vmatpush.msra.mxu0 %v430
      %511 = vmatpush.msra.mxu0 %v428
      %512 = vmatpush.msra.mxu0 %v426
      %513 = vmatpush.msra.mxu0 %v424
      %514 = vmatpush.msra.mxu0 %v422
      %515 = vmatpush.msra.mxu0 %v420
      %516 = vmatmul.f32.gmra.mxu0 %v436
      %v517 = vpop.f32.mrf.mxu0
      %v518 = vadd.f32 0.0, %v517
      %519 = vmatmul.f32.gmra.mxu0 %v439
      %v520 = vpop.f32.mrf.mxu0
      %v521 = vadd.f32 0.0, %v520
      %522 = vmatmul.f32.gmra.mxu0 %v442
      %v523 = vpop.f32.mrf.mxu0
      %v524 = vadd.f32 0.0, %v523
      %525 = vmatmul.f32.gmra.mxu0 %v445
      %v526 = vpop.f32.mrf.mxu0
      %v527 = vadd.f32 0.0, %v526
      %528 = vmatmul.f32.gmra.mxu0 %v448
      %v529 = vpop.f32.mrf.mxu0
      %v530 = vadd.f32 0.0, %v529
      %531 = vmatmul.f32.gmra.mxu0 %v451
      %v532 = vpop.f32.mrf.mxu0
      %v533 = vadd.f32 0.0, %v532
      %534 = vmatmul.f32.gmra.mxu0 %v454
      %v535 = vpop.f32.mrf.mxu0
      %v536 = vadd.f32 0.0, %v535
      %537 = vmatmul.f32.gmra.mxu0 %v457
      %v538 = vpop.f32.mrf.mxu0
      %v539 = vadd.f32 0.0, %v538
      %540 = vdwg.mxu0
      %541 = vst [vmem:[%s201] sm:$0xff] %v477
      %542 = vst.msk [vmem:[%s201 + $0x8] sm:$0xff] %vm211, %v518
      %543 = vst [vmem:[%s201 + $0x10] sm:$0xff] %v480
      %544 = vst.msk [vmem:[%s201 + $0x18] sm:$0xff] %vm211, %v521
      %545 = vst [vmem:[%s201 + $0x20] sm:$0xff] %v483
      %546 = vst.msk [vmem:[%s201 + $0x28] sm:$0xff] %vm211, %v524
      %547 = vst [vmem:[%s201 + $0x30] sm:$0xff] %v486
      %548 = vst.msk [vmem:[%s201 + $0x38] sm:$0xff] %vm211, %v527
      %549 = vst [vmem:[%s201 + $0x40] sm:$0xff] %v489
      %550 = vst.msk [vmem:[%s201 + $0x48] sm:$0xff] %vm211, %v530
      %551 = vst [vmem:[%s201 + $0x50] sm:$0xff] %v492
      %552 = vst.msk [vmem:[%s201 + $0x58] sm:$0xff] %vm211, %v533
      %553 = vst [vmem:[%s201 + $0x60] sm:$0xff] %v495
      %554 = vst.msk [vmem:[%s201 + $0x68] sm:$0xff] %vm211, %v536
      %555 = vst [vmem:[%s201 + $0x70] sm:$0xff] %v498
      %556 = vst.msk [vmem:[%s201 + $0x78] sm:$0xff] %vm211, %v539
      %s557 = smul.u32 8, %s15
      %p558 = scmp.lt.s32.totalorder %s557, 15
      %s559 = scalar_select %p558, %s557, 15
      %s560 = smul.addr %s559, 2
      %s561 = smul.addr %s560, 8
      %s562 = scalar_lea.vmem %s4, %s561
      // Predicated region
      $region37: #{tpu_custom_call.1} parent=35 // pred_check
        %p563 = pneg %p122
      $region38: #{tpu_custom_call.1} parent=35 // pred_check_branch
        %565 = sbr.rel (%p563) target = $region40
      $region39: #{tpu_custom_call.1} parent=35 // pred_region
        %s566 = smul.u32 8, %s15
      $region40: #{tpu_custom_call.1} parent=35 // pred_fallthru
        _
    $region36: #{tpu_custom_call.1} parent=5 // pred_fallthru
      _
    %p567 = scmp.le.s32.totalorder 2, %s10
    // Predicated region
    $region41: #{tpu_custom_call.1} parent=5 // pred_check
      %p568 = pneg %p567
    $region42: #{tpu_custom_call.1} parent=5 // pred_check_branch
      %570 = sbr.rel (%p568) target = $region44
    $region43: #{tpu_custom_call.1} parent=5 // pred_region
      %s571 = ssub.s32 %s10, 2
      // Predicated region
      $region45: #{tpu_custom_call.1} parent=43 // pred_check
        %p572 = pneg %p128
      $region46: #{tpu_custom_call.1} parent=43 // pred_check_branch
        %574 = sbr.rel (%p572) target = $region48
      $region47: #{tpu_custom_call.1} parent=43 // pred_region
        %s575 = smul.u32 8, %s16
        %p576 = scmp.lt.s32.totalorder %s575, 15
        %s577 = scalar_select %p576, %s575, 15
        %s578 = smul.addr %s577, 2
        %s579 = smul.addr %s578, 8
        %s580 = scalar_lea.vmem %s4, %s579
      $region48: #{tpu_custom_call.1} parent=43 // pred_fallthru
        _
    $region44: #{tpu_custom_call.1} parent=5 // pred_fallthru
      _
  $region6: #{tpu_custom_call.1} parent=0 // loop_footer
    %s14 = sadd.s32 1, %s10
  $region7: #{tpu_custom_call.1} parent=0 // loop_footer_branch
    %9 = sbr.rel target = $region3
  $region8: #{tpu_custom_call.1} parent=0 // loop_exit
    _

</llo_original>
